<compile_context>
chip_gen: v7x
topology: tpu7x:2x2x1
jax: 0.10.0
libtpu: 0.0.40
codegen_flags: <defaults>
</compile_context>

<pallas_src>
import jax
import jax.numpy as jnp
from jax.experimental import pallas as pl
from jax.experimental.pallas import tpu as pltpu


def _round_up(x, m):
    return (x + m - 1) // m * m


def _make_mlp_kernel(n_hidden, output_layer, matmul_dtype):
    """Fused MLP kernel. refs = (x, w0, b0, w1, b1, ..., [w_out_row, b_out], o)."""

    def kernel(x_ref, *refs):
        o_ref = refs[-1]
        p = refs[:-1]
        h = x_ref[...].astype(jnp.float32)
        for li in range(n_hidden):                 # static Python unroll over layers
            w = p[2 * li][...]
            b = p[2 * li + 1][...]                 # (1, N) row -> broadcasts over batch rows
            if matmul_dtype is not None:
                acc = jnp.dot(h.astype(matmul_dtype), w.astype(matmul_dtype),
                              preferred_element_type=jnp.float32)
            else:
                acc = jnp.dot(h, w, preferred_element_type=jnp.float32)
            # f32 epilogue: bias add + ReLU on the VPU.
            h = jnp.maximum(acc + b, 0.0)
            # Dropout(p): inference-mode identity -> intentionally a no-op.
        if output_layer:
            w_out = p[2 * n_hidden][...].astype(jnp.float32)   # (1, K_last) row vector
            b_out = p[2 * n_hidden + 1][...]                   # (1, 1)
            # N=1 output: VPU multiply + XLU lane-reduce instead of a 1-lane MXU matmul.
            y = jnp.sum(h * w_out, axis=-1, keepdims=True) + b_out
        else:
            y = h
        o_ref[...] = y.astype(o_ref.dtype)

    return kernel


def mlp_pallas(x, params, *, output_layer=True, block_m=512, matmul_dtype=None):
    """Fused MLP forward. x: (M, input_dim); params: list of (W:(K,N), b:(N,))."""
    M, K_in = x.shape
    n_hidden = len(params) - (1 if output_layer else 0)

    # Batch tile: multiple of 8 (f32 sublane), 16 when feeding bf16 to the MXU.
    row_align = 16 if matmul_dtype == jnp.bfloat16 else 8
    TM = max(row_align, min(_round_up(block_m, row_align), _round_up(M, row_align)))
    M_pad = _round_up(M, TM)
    x_p = jnp.pad(x, ((0, M_pad - M), (0, 0))) if M_pad != M else x

    flat_inputs = [x_p]
    in_specs = [pl.BlockSpec((TM, K_in), lambda i: (i, 0))]
    for li in range(n_hidden):
        w, b = params[li]
        K, N = w.shape
        flat_inputs += [w, b.reshape(1, N)]
        in_specs += [pl.BlockSpec((K, N), lambda i: (0, 0)),    # weights resident across grid
                     pl.BlockSpec((1, N), lambda i: (0, 0))]
    if output_layer:
        w, b = params[-1]                                       # (K_last, 1), (1,)
        K_last = w.shape[0]
        flat_inputs += [w.reshape(1, K_last), b.reshape(1, 1)]  # pre-transposed row weight
        in_specs += [pl.BlockSpec((1, K_last), lambda i: (0, 0)),
                     pl.BlockSpec((1, 1), lambda i: (0, 0))]
        N_out = 1
    else:
        N_out = params[n_hidden - 1][0].shape[1]

    grid = (M_pad // TM,)
    out_specs = pl.BlockSpec((TM, N_out), lambda i: (i, 0))

    # Advisory cost estimate for XLA's scheduler.
    flops = 0
    for li in range(n_hidden):
        w, _ = params[li]
        flops += 2 * M_pad * w.shape[0] * w.shape[1]
    if output_layer:
        flops += 2 * M_pad * params[-1][0].shape[0]
    bytes_accessed = sum(int(a.size) * a.dtype.itemsize for a in flat_inputs)
    bytes_accessed += M_pad * N_out * x.dtype.itemsize
    cost = pl.CostEstimate(flops=int(flops), transcendentals=0,
                           bytes_accessed=int(bytes_accessed))

    # Scoped-VMEM sizing: double-buffered batch tiles + resident params, with headroom.
    # Floor at the smallest default (16 MiB), cap at 32 MiB (safe on v5e/v6e/v7x).
    resident = sum(int(a.size) * 4 for a in flat_inputs[1:])
    tile_bytes = 2 * TM * K_in * 4 + 2 * TM * N_out * 4 + 2 * resident
    vmem_limit = int(min(32 * 1024 * 1024, max(16 * 1024 * 1024, 4 * tile_bytes)))

    kernel = _make_mlp_kernel(n_hidden, output_layer, matmul_dtype)
    out = pl.pallas_call(
        kernel,
        out_shape=jax.ShapeDtypeStruct((M_pad, N_out), x.dtype),
        grid=grid,
        in_specs=in_specs,
        out_specs=out_specs,
        compiler_params=pltpu.CompilerParams(
            dimension_semantics=("parallel",),    # megacore sharding of batch tiles
            vmem_limit_bytes=vmem_limit),
        cost_estimate=cost,
    )(*flat_inputs)
    return out[:M] if M_pad != M else out


def init_mlp_params(key, input_dim, embed_dims, output_layer=True):
    """Deterministic parameter init mirroring the PyTorch module's layer shapes.
    Weights stored as (in_dim, out_dim) so the kernel computes x @ W + b."""
    params = []
    dims_in = input_dim
    for embed_dim in embed_dims:
        key, kw, kb = jax.random.split(key, 3)
        bound = 1.0 / jnp.sqrt(dims_in)
        w = jax.random.uniform(kw, (dims_in, embed_dim), jnp.float32, -bound, bound)
        b = jax.random.uniform(kb, (embed_dim,), jnp.float32, -bound, bound)
        params.append((w, b))
        dims_in = embed_dim
    if output_layer:
        key, kw, kb = jax.random.split(key, 3)
        bound = 1.0 / jnp.sqrt(dims_in)
        w = jax.random.uniform(kw, (dims_in, 1), jnp.float32, -bound, bound)
        b = jax.random.uniform(kb, (1,), jnp.float32, -bound, bound)
        params.append((w, b))
    return params


def mlp_reference(x, params, output_layer=True):
    n_hidden = len(params) - (1 if output_layer else 0)
    h = x
    for li in range(n_hidden):
        w, b = params[li]
        h = jnp.maximum(h @ w + b, 0.0)
    if output_layer:
        w, b = params[-1]
        h = h @ w + b
    return h


if __name__ == "__main__":
    key = jax.random.PRNGKey(0)
    batch, input_dim = 8, 32
    embed_dims = (64, 32)
    dropout = 0.2  # inference: identity (no-op in the kernel)

    key, kx, kp = jax.random.split(key, 3)
    x = jax.random.normal(kx, (batch, input_dim), jnp.float32)
    params = init_mlp_params(kp, input_dim, embed_dims, output_layer=True)

    # Fused f32 kernel (single pallas_call for the whole MLP).
    out = jax.block_until_ready(mlp_pallas(x, params, output_layer=True))
    ref = mlp_reference(x, params, output_layer=True)
    assert out.shape == (batch, 1)
    assert jnp.allclose(out, ref, atol=1e-4, rtol=1e-4)

    # bf16 MXU-input path (v6e/v7x): f32 accumulate + f32 epilogue.
    out_bf16 = jax.block_until_ready(
        mlp_pallas(x, params, output_layer=True, matmul_dtype=jnp.bfloat16))
    assert out_bf16.shape == (batch, 1)
    assert jnp.allclose(out_bf16, ref, atol=5e-2, rtol=5e-2)

    # Larger, non-multiple-of-tile batch exercises batch tiling + padding + multi-step grid.
    key, kx2 = jax.random.split(key)
    x2 = jax.random.normal(kx2, (200, input_dim), jnp.float32)
    out2 = jax.block_until_ready(mlp_pallas(x2, params, output_layer=True, block_m=64))
    ref2 = mlp_reference(x2, params, output_layer=True)
    assert out2.shape == (200, 1)
    assert jnp.allclose(out2, ref2, atol=1e-4, rtol=1e-4)

    print("KERNEL_OK")
</pallas_src>

<mosaic_0001>
module attributes {stable_mosaic.version = 11 : i64} {
  func.func @kernel(%arg0: i32, %arg1: memref<8x32xf32, #tpu.memory_space<vmem>>, %arg2: memref<32x64xf32, #tpu.memory_space<vmem>>, %arg3: memref<1x64xf32, #tpu.memory_space<vmem>>, %arg4: memref<64x32xf32, #tpu.memory_space<vmem>>, %arg5: memref<1x32xf32, #tpu.memory_space<vmem>>, %arg6: memref<1x32xf32, #tpu.memory_space<vmem>>, %arg7: memref<1x1xf32, #tpu.memory_space<vmem>>, %arg8: memref<8x1xf32, #tpu.memory_space<vmem>>) attributes {dimension_semantics = [#tpu.dimension_semantics<parallel>], iteration_bounds = array<i64: 1>, scalar_prefetch = 0 : i64, scratch_operands = 0 : i64, tpu.core_type = #tpu.core_type<tc>, window_params = [{transform_indices = @transform_0, window_bounds = array<i64: 8, 32>}, {pipeline_mode = #tpu.pipeline_mode<synchronous>, transform_indices = @transform_1, window_bounds = array<i64: 32, 64>}, {pipeline_mode = #tpu.pipeline_mode<synchronous>, transform_indices = @transform_2, window_bounds = array<i64: 1, 64>}, {pipeline_mode = #tpu.pipeline_mode<synchronous>, transform_indices = @transform_3, window_bounds = array<i64: 64, 32>}, {pipeline_mode = #tpu.pipeline_mode<synchronous>, transform_indices = @transform_4, window_bounds = array<i64: 1, 32>}, {pipeline_mode = #tpu.pipeline_mode<synchronous>, transform_indices = @transform_5, window_bounds = array<i64: 1, 32>}, {pipeline_mode = #tpu.pipeline_mode<synchronous>, transform_indices = @transform_6, window_bounds = array<i64: 1, 1>}, {transform_indices = @transform_7, window_bounds = array<i64: 8, 1>}]} {
    %c0 = arith.constant 0 : index
    %c0_0 = arith.constant 0 : index
    %0 = vector.load %arg1[%c0, %c0_0] : memref<8x32xf32, #tpu.memory_space<vmem>>, vector<8x32xf32>
    %c0_1 = arith.constant 0 : index
    %c0_2 = arith.constant 0 : index
    %1 = vector.load %arg2[%c0_1, %c0_2] : memref<32x64xf32, #tpu.memory_space<vmem>>, vector<32x64xf32>
    %c0_3 = arith.constant 0 : index
    %c0_4 = arith.constant 0 : index
    %2 = vector.load %arg3[%c0_3, %c0_4] : memref<1x64xf32, #tpu.memory_space<vmem>>, vector<1x64xf32>
    %cst = arith.constant dense<0.000000e+00> : vector<8x64xf32>
    %3 = tpu.matmul %0, %1, %cst {dimension_numbers = #tpu.dot_dimension_numbers<[1], [0], [0], [1], [0, 0, 1, 1], [], []>} : vector<8x32xf32>, vector<32x64xf32>, vector<8x64xf32> -> vector<8x64xf32>
    %4 = vector.broadcast %2 : vector<1x64xf32> to vector<8x64xf32>
    %5 = arith.addf %3, %4 : vector<8x64xf32>
    %cst_5 = arith.constant 0.000000e+00 : f32
    %6 = vector.broadcast %cst_5 : f32 to vector<8x64xf32>
    %7 = arith.maximumf %5, %6 : vector<8x64xf32>
    %c0_6 = arith.constant 0 : index
    %c0_7 = arith.constant 0 : index
    %8 = vector.load %arg4[%c0_6, %c0_7] : memref<64x32xf32, #tpu.memory_space<vmem>>, vector<64x32xf32>
    %c0_8 = arith.constant 0 : index
    %c0_9 = arith.constant 0 : index
    %9 = vector.load %arg5[%c0_8, %c0_9] : memref<1x32xf32, #tpu.memory_space<vmem>>, vector<1x32xf32>
    %cst_10 = arith.constant dense<0.000000e+00> : vector<8x32xf32>
    %10 = tpu.matmul %7, %8, %cst_10 {dimension_numbers = #tpu.dot_dimension_numbers<[1], [0], [0], [1], [0, 0, 1, 1], [], []>} : vector<8x64xf32>, vector<64x32xf32>, vector<8x32xf32> -> vector<8x32xf32>
    %11 = vector.broadcast %9 : vector<1x32xf32> to vector<8x32xf32>
    %12 = arith.addf %10, %11 : vector<8x32xf32>
    %cst_11 = arith.constant 0.000000e+00 : f32
    %13 = vector.broadcast %cst_11 : f32 to vector<8x32xf32>
    %14 = arith.maximumf %12, %13 : vector<8x32xf32>
    %c0_12 = arith.constant 0 : index
    %c0_13 = arith.constant 0 : index
    %15 = vector.load %arg6[%c0_12, %c0_13] : memref<1x32xf32, #tpu.memory_space<vmem>>, vector<1x32xf32>
    %c0_14 = arith.constant 0 : index
    %c0_15 = arith.constant 0 : index
    %16 = vector.load %arg7[%c0_14, %c0_15] : memref<1x1xf32, #tpu.memory_space<vmem>>, vector<1x1xf32>
    %17 = vector.broadcast %15 : vector<1x32xf32> to vector<8x32xf32>
    %18 = arith.mulf %14, %17 : vector<8x32xf32>
    %cst_16 = arith.constant dense<0.000000e+00> : vector<8xf32>
    %19 = vector.multi_reduction <add>, %18, %cst_16 [1] : vector<8x32xf32> to vector<8xf32>
    %20 = vector.shape_cast %19 : vector<8xf32> to vector<8x1xf32>
    %21 = vector.broadcast %16 : vector<1x1xf32> to vector<8x1xf32>
    %22 = arith.addf %20, %21 : vector<8x1xf32>
    %c0_17 = arith.constant 0 : index
    %c0_18 = arith.constant 0 : index
    %23 = vector.load %arg8[%c0_17, %c0_18] : memref<8x1xf32, #tpu.memory_space<vmem>>, vector<8x1xf32>
    tpu.vector_store %arg8[%c0_17, %c0_18], %22 {strides = array<i32>} : memref<8x1xf32, #tpu.memory_space<vmem>>, vector<8x1xf32>,
    return
  }
  func.func @transform_0(%arg0: i32) -> (i32, i32) {
    %c0_i32 = arith.constant 0 : i32
    %c0_i32_0 = arith.constant 0 : i32
    return %arg0, %c0_i32 : i32, i32
  }
  func.func @transform_1(%arg0: i32) -> (i32, i32) {
    %c0_i32 = arith.constant 0 : i32
    %c0_i32_0 = arith.constant 0 : i32
    %c0_i32_1 = arith.constant 0 : i32
    return %c0_i32, %c0_i32_0 : i32, i32
  }
  func.func @transform_2(%arg0: i32) -> (i32, i32) {
    %c0_i32 = arith.constant 0 : i32
    %c0_i32_0 = arith.constant 0 : i32
    %c0_i32_1 = arith.constant 0 : i32
    return %c0_i32, %c0_i32_0 : i32, i32
  }
  func.func @transform_3(%arg0: i32) -> (i32, i32) {
    %c0_i32 = arith.constant 0 : i32
    %c0_i32_0 = arith.constant 0 : i32
    %c0_i32_1 = arith.constant 0 : i32
    return %c0_i32, %c0_i32_0 : i32, i32
  }
  func.func @transform_4(%arg0: i32) -> (i32, i32) {
    %c0_i32 = arith.constant 0 : i32
    %c0_i32_0 = arith.constant 0 : i32
    %c0_i32_1 = arith.constant 0 : i32
    return %c0_i32, %c0_i32_0 : i32, i32
  }
  func.func @transform_5(%arg0: i32) -> (i32, i32) {
    %c0_i32 = arith.constant 0 : i32
    %c0_i32_0 = arith.constant 0 : i32
    %c0_i32_1 = arith.constant 0 : i32
    return %c0_i32, %c0_i32_0 : i32, i32
  }
  func.func @transform_6(%arg0: i32) -> (i32, i32) {
    %c0_i32 = arith.constant 0 : i32
    %c0_i32_0 = arith.constant 0 : i32
    %c0_i32_1 = arith.constant 0 : i32
    return %c0_i32, %c0_i32_0 : i32, i32
  }
  func.func @transform_7(%arg0: i32) -> (i32, i32) {
    %c0_i32 = arith.constant 0 : i32
    %c0_i32_0 = arith.constant 0 : i32
    return %arg0, %c0_i32 : i32, i32
  }
}

</mosaic_0001>

<llo_original>
// kernel: tpu_custom_call.1
$region0: #{tpu_custom_call.1}
  #allocation0 [shape = 'u32[]', space=smem, size = 0x4, offset = 0x4, fixed_abs, tag = 'smem constant byte address 0x4 - core index']
  #allocation1 [shape = 'u32[144,128]{1,0:T(1,128)}', space=vmem, size = 0x12000, scoped, tag = 'internal scratch']
  #allocation2 [shape = 'f32[1,1]{1,0:T(1,128)S(1)}', space=vmem, size = 0x200, scoped, tag = 'scoped memory for tpu_custom_call.1']
  %s0 = inlined_call_operand.vmem [shape: f32[8,32], index: 0, kind: input, shape index: {}]
  %s1 = inlined_call_operand.vmem [shape: f32[32,64], index: 1, kind: input, shape index: {}]
  %s2 = inlined_call_operand.vmem [shape: f32[1,64], index: 2, kind: input, shape index: {}]
  %s3 = inlined_call_operand.vmem [shape: f32[64,32], index: 3, kind: input, shape index: {}]
  %s4 = inlined_call_operand.vmem [shape: f32[1,32], index: 4, kind: input, shape index: {}]
  %s5 = inlined_call_operand.vmem [shape: f32[1,32], index: 5, kind: input, shape index: {}]
  %s6 = inlined_call_operand.<no memory space> [shape: f32[1,1], index: 6, kind: input, shape index: {}]
  %s7 = inlined_call_operand.vmem [shape: f32[8,1], index: 7, kind: output, shape index: {}]
  %s8 = sld [smem:[#allocation0]]
  $region38: #{tpu_custom_call.1} parent=0
    _
  %s10 = ssub.s32 1, %s8
  %s11 = scalar_select 0, %s10, %s8
  %v12 = vstv %s6
  %13 = vst [vmem:[#allocation2] sm:$0x1] %v12
  // Predicated region
  $region2: #{tpu_custom_call.1} parent=0 // pred_check
    _
  $region3: #{tpu_custom_call.1} parent=0 // pred_check_branch
    %15 = sbr.rel (0) target = $region5
  $region4: #{tpu_custom_call.1} parent=0 // pred_region
    _
  $region5: #{tpu_custom_call.1} parent=0 // pred_fallthru
    _
  // Predicated region
  $region6: #{tpu_custom_call.1} parent=0 // pred_check
    _
  $region7: #{tpu_custom_call.1} parent=0 // pred_check_branch
    %17 = sbr.rel (0) target = $region9
  $region8: #{tpu_custom_call.1} parent=0 // pred_region
    _
  $region9: #{tpu_custom_call.1} parent=0 // pred_fallthru
    _
  // Predicated region
  $region10: #{tpu_custom_call.1} parent=0 // pred_check
    _
  $region11: #{tpu_custom_call.1} parent=0 // pred_check_branch
    %19 = sbr.rel (0) target = $region13
  $region12: #{tpu_custom_call.1} parent=0 // pred_region
    _
  $region13: #{tpu_custom_call.1} parent=0 // pred_fallthru
    _
  // Predicated region
  $region14: #{tpu_custom_call.1} parent=0 // pred_check
    _
  $region15: #{tpu_custom_call.1} parent=0 // pred_check_branch
    %21 = sbr.rel (0) target = $region17
  $region16: #{tpu_custom_call.1} parent=0 // pred_region
    _
  $region17: #{tpu_custom_call.1} parent=0 // pred_fallthru
    _
  // Predicated region
  $region18: #{tpu_custom_call.1} parent=0 // pred_check
    _
  $region19: #{tpu_custom_call.1} parent=0 // pred_check_branch
    %23 = sbr.rel (0) target = $region21
  $region20: #{tpu_custom_call.1} parent=0 // pred_region
    _
  $region21: #{tpu_custom_call.1} parent=0 // pred_fallthru
    _
  // Predicated region
  $region22: #{tpu_custom_call.1} parent=0 // pred_check
    _
  $region23: #{tpu_custom_call.1} parent=0 // pred_check_branch
    %25 = sbr.rel (0) target = $region25
  $region24: #{tpu_custom_call.1} parent=0 // pred_region
    _
  $region25: #{tpu_custom_call.1} parent=0 // pred_fallthru
    _
  // Predicated region
  $region26: #{tpu_custom_call.1} parent=0 // pred_check
    _
  $region27: #{tpu_custom_call.1} parent=0 // pred_check_branch
    %27 = sbr.rel (0) target = $region29
  $region28: #{tpu_custom_call.1} parent=0 // pred_region
    _
  $region29: #{tpu_custom_call.1} parent=0 // pred_fallthru
    _
  %v28 = vld [vmem:[%s0] sm:$0xff]
  %v29 = vld [vmem:[%s1] sm:$0xff]
  %v30 = vld [vmem:[%s1 + $0x8] sm:$0xff]
  %v31 = vld [vmem:[%s1 + $0x10] sm:$0xff]
  %v32 = vld [vmem:[%s1 + $0x18] sm:$0xff]
  %v33 = vld [vmem:[%s2] sm:$0x1]
  %v35 = vlaneseq
  %v36 = vshrl.u32 %v35, 7
  %v37 = vsub.s32 0, %v36
  %v38 = vrot.slane %v33, %v37
  %vm40 = vcmask 261120
  %v42 = vsel %vm40, %v28, 0
  %44 = vmatprep.subr.mxu0 0.0
  %45 = vmatpush1.msra.mxu0 %v29
  %46 = vmatprep.subr.mxu0 0.0
  %47 = vmatpush1.msra.mxu0 %v30
  %48 = vmatprep.subr.mxu0 0.0
  %49 = vmatpush1.msra.mxu0 %v31
  %50 = vmatprep.subr.mxu0 0.0
  %51 = vmatpush1.msra.mxu0 %v32
  %52 = vmatprep.subr.mxu0 0.0
  %53 = vmatpush1.msra.mxu0 0.0
  %54 = vmatprep.subr.mxu0 0.0
  %55 = vmatpush1.msra.mxu0 0.0
  %56 = vmatprep.subr.mxu0 0.0
  %57 = vmatpush1.msra.mxu0 0.0
  %58 = vmatprep.subr.mxu0 0.0
  %59 = vmatpush1.msra.mxu0 0.0
  %60 = vmatprep.subr.mxu0 0.0
  %61 = vmatpush1.msra.mxu0 0.0
  %62 = vmatprep.subr.mxu0 0.0
  %63 = vmatpush1.msra.mxu0 0.0
  %64 = vmatprep.subr.mxu0 0.0
  %65 = vmatpush1.msra.mxu0 0.0
  %66 = vmatprep.subr.mxu0 0.0
  %67 = vmatpush1.msra.mxu0 0.0
  %68 = vmatprep.subr.mxu0 0.0
  %69 = vmatpush1.msra.mxu0 0.0
  %70 = vmatprep.subr.mxu0 0.0
  %71 = vmatpush1.msra.mxu0 0.0
  %72 = vmatprep.subr.mxu0 0.0
  %73 = vmatpush1.msra.mxu0 0.0
  %74 = vmatprep.subr.mxu0 0.0
  %75 = vmatpush1.msra.mxu0 0.0
  %76 = vmatprep.subr.mxu0 0.0
  %77 = vmatpush1.msra.mxu0 0.0
  %78 = vmatprep.subr.mxu0 0.0
  %79 = vmatpush1.msra.mxu0 0.0
  %80 = vmatprep.subr.mxu0 0.0
  %81 = vmatpush1.msra.mxu0 0.0
  %82 = vmatprep.subr.mxu0 0.0
  %83 = vmatpush1.msra.mxu0 0.0
  %84 = vmatprep.subr.mxu0 0.0
  %85 = vmatpush1.msra.mxu0 0.0
  %86 = vmatprep.subr.mxu0 0.0
  %87 = vmatpush1.msra.mxu0 0.0
  %88 = vmatprep.subr.mxu0 0.0
  %89 = vmatpush1.msra.mxu0 0.0
  %90 = vmatprep.subr.mxu0 0.0
  %91 = vmatpush1.msra.mxu0 0.0
  %92 = vmatprep.subr.mxu0 0.0
  %93 = vmatpush1.msra.mxu0 0.0
  %94 = vmatprep.subr.mxu0 0.0
  %95 = vmatpush1.msra.mxu0 0.0
  %96 = vmatprep.subr.mxu0 0.0
  %97 = vmatpush1.msra.mxu0 0.0
  %98 = vmatprep.subr.mxu0 0.0
  %99 = vmatpush1.msra.mxu0 0.0
  %100 = vmatprep.subr.mxu0 0.0
  %101 = vmatpush1.msra.mxu0 0.0
  %102 = vmatprep.subr.mxu0 0.0
  %103 = vmatpush1.msra.mxu0 0.0
  %104 = vmatprep.subr.mxu0 0.0
  %105 = vmatpush1.msra.mxu0 0.0
  %106 = vmatprep.subr.mxu0 0.0
  %107 = vmatpush1.msra.mxu0 0.0
  %108 = vmatprep.mubr.f32.mxu0 0.0
  %109 = vmatmul.mubr.f32.gmra.mrb[0].mxu0 %v42
  %v110 = vpop.f32.mrb[0].mxu0
  %v111 = vadd.f32 %v38, %v110
  %v112 = vpop.f32.mrb[0].mxu0
  %113 = vdwg.mxu0
  %v114 = vmax.f32 %v111, 0.0
  %v115 = vld [vmem:[%s3] sm:$0xff]
  %v116 = vld [vmem:[%s3 + $0x8] sm:$0xff]
  %v117 = vld [vmem:[%s3 + $0x10] sm:$0xff]
  %v118 = vld [vmem:[%s3 + $0x18] sm:$0xff]
  %v119 = vld [vmem:[%s3 + $0x20] sm:$0xff]
  %v120 = vld [vmem:[%s3 + $0x28] sm:$0xff]
  %v121 = vld [vmem:[%s3 + $0x30] sm:$0xff]
  %v122 = vld [vmem:[%s3 + $0x38] sm:$0xff]
  %v123 = vld [vmem:[%s4] sm:$0x1]
  %v125 = vlaneseq
  %v126 = vshrl.u32 %v125, 7
  %v127 = vsub.s32 0, %v126
  %v128 = vrot.slane %v123, %v127
  %vm130 = vcmask 523264
  %v132 = vsel %vm130, %v114, 0
  %134 = vmatprep.subr.mxu0 0.0
  %135 = vmatpush1.msra.mxu0 %v115
  %136 = vmatprep.subr.mxu0 0.0
  %137 = vmatpush1.msra.mxu0 %v116
  %138 = vmatprep.subr.mxu0 0.0
  %139 = vmatpush1.msra.mxu0 %v117
  %140 = vmatprep.subr.mxu0 0.0
  %141 = vmatpush1.msra.mxu0 %v118
  %142 = vmatprep.subr.mxu0 0.0
  %143 = vmatpush1.msra.mxu0 %v119
  %144 = vmatprep.subr.mxu0 0.0
  %145 = vmatpush1.msra.mxu0 %v120
  %146 = vmatprep.subr.mxu0 0.0
  %147 = vmatpush1.msra.mxu0 %v121
  %148 = vmatprep.subr.mxu0 0.0
  %149 = vmatpush1.msra.mxu0 %v122
  %150 = vmatprep.subr.mxu0 0.0
  %151 = vmatpush1.msra.mxu0 0.0
  %152 = vmatprep.subr.mxu0 0.0
  %153 = vmatpush1.msra.mxu0 0.0
  %154 = vmatprep.subr.mxu0 0.0
  %155 = vmatpush1.msra.mxu0 0.0
  %156 = vmatprep.subr.mxu0 0.0
  %157 = vmatpush1.msra.mxu0 0.0
  %158 = vmatprep.subr.mxu0 0.0
  %159 = vmatpush1.msra.mxu0 0.0
  %160 = vmatprep.subr.mxu0 0.0
  %161 = vmatpush1.msra.mxu0 0.0
  %162 = vmatprep.subr.mxu0 0.0
  %163 = vmatpush1.msra.mxu0 0.0
  %164 = vmatprep.subr.mxu0 0.0
  %165 = vmatpush1.msra.mxu0 0.0
  %166 = vmatprep.subr.mxu0 0.0
  %167 = vmatpush1.msra.mxu0 0.0
  %168 = vmatprep.subr.mxu0 0.0
  %169 = vmatpush1.msra.mxu0 0.0
  %170 = vmatprep.subr.mxu0 0.0
  %171 = vmatpush1.msra.mxu0 0.0
  %172 = vmatprep.subr.mxu0 0.0
  %173 = vmatpush1.msra.mxu0 0.0
  %174 = vmatprep.subr.mxu0 0.0
  %175 = vmatpush1.msra.mxu0 0.0
  %176 = vmatprep.subr.mxu0 0.0
  %177 = vmatpush1.msra.mxu0 0.0
  %178 = vmatprep.subr.mxu0 0.0
  %179 = vmatpush1.msra.mxu0 0.0
  %180 = vmatprep.subr.mxu0 0.0
  %181 = vmatpush1.msra.mxu0 0.0
  %182 = vmatprep.subr.mxu0 0.0
  %183 = vmatpush1.msra.mxu0 0.0
  %184 = vmatprep.subr.mxu0 0.0
  %185 = vmatpush1.msra.mxu0 0.0
  %186 = vmatprep.subr.mxu0 0.0
  %187 = vmatpush1.msra.mxu0 0.0
  %188 = vmatprep.subr.mxu0 0.0
  %189 = vmatpush1.msra.mxu0 0.0
  %190 = vmatprep.subr.mxu0 0.0
  %191 = vmatpush1.msra.mxu0 0.0
  %192 = vmatprep.subr.mxu0 0.0
  %193 = vmatpush1.msra.mxu0 0.0
  %194 = vmatprep.subr.mxu0 0.0
  %195 = vmatpush1.msra.mxu0 0.0
  %196 = vmatprep.subr.mxu0 0.0
  %197 = vmatpush1.msra.mxu0 0.0
  %198 = vmatprep.mubr.f32.mxu0 0.0
  %199 = vmatmul.mubr.f32.gmra.mrb[0].mxu0 %v132
  %v200 = vpop.f32.mrb[0].mxu0
  %v201 = vadd.f32 %v128, %v200
  %v202 = vpop.f32.mrb[0].mxu0
  %203 = vdwg.mxu0
  %v204 = vmax.f32 %v201, 0.0
  %v205 = vld [vmem:[%s5] sm:$0x1]
  %v206 = vld [vmem:[#allocation2] sm:$0x1]
  %v208 = vlaneseq
  %v209 = vshrl.u32 %v208, 7
  %v210 = vsub.s32 0, %v209
  %v211 = vrot.slane %v205, %v210
  %v213 = vmul.f32 %v204, %v211
  %v214 = vsel %vm40, %v213, 0.0
  %215 = vadd.xlane.f32.xlu0 %v214
  %v216 = vpop.xlane.xlu0 %215
  %v218 = vlaneseq
  %v219 = vshrl.u32 %v218, 7
  %v220 = vsub.s32 0, %v219
  %v221 = vrot.slane %v206, %v220
  %v223 = vadd.f32 %v216, %v221
  %vm224 = vcmask 7168
  %225 = vst.msk [vmem:[%s7] sm:$0xff] %vm224, %v223
  // Predicated region
  $region30: #{tpu_custom_call.1} parent=0 // pred_check
    _
  $region31: #{tpu_custom_call.1} parent=0 // pred_check_branch
    %227 = sbr.rel (0) target = $region33
  $region32: #{tpu_custom_call.1} parent=0 // pred_region
    _
  $region33: #{tpu_custom_call.1} parent=0 // pred_fallthru
    _
  // Predicated region
  $region34: #{tpu_custom_call.1} parent=0 // pred_check
    _
  $region35: #{tpu_custom_call.1} parent=0 // pred_check_branch
    %229 = sbr.rel (0) target = $region37
  $region36: #{tpu_custom_call.1} parent=0 // pred_region
    _
  $region37: #{tpu_custom_call.1} parent=0 // pred_fallthru
    _

</llo_original>
